<compile_context>
chip_gen: v7x
topology: tpu7x:2x2x1
jax: 0.10.0
libtpu: 0.0.40
codegen_flags: <defaults>
</compile_context>

<pallas_src>
import jax
import jax.numpy as jnp
from jax.experimental import pallas as pl
from jax.experimental.pallas import tpu as pltpu

NUM_FEATURES = 32      # stand-in for XtrainData.shape[1]
_LANES = 128           # TPU vreg lane width
_TM_MAX = 4096         # max batch rows per grid step (multiple of 128; 512 KiB f32 x-tile)


def _linear_kernel(x_ref, w_ref, b_ref, o_ref):
    # x_ref: (R, 128, F) in the input's native dtype
    # w_ref: (1, 1, F) weight row (VMEM)
    # b_ref: (1, 1) bias scalar (SMEM)
    # o_ref: (R, 128) lane-dense output; (row r, lane c) <-> batch row r*128 + c
    x = x_ref[...].astype(jnp.float32)
    w = w_ref[...].astype(jnp.float32)
    b = b_ref[0, 0]
    # Linear(F, 1): per-row dot product = VPU multiply + XLU lane reduce (no MXU pass,
    # no result-FIFO pop) -- the DMA stream of x is the real bottleneck.
    y = jnp.sum(x * w, axis=-1) + b
    o_ref[...] = y.astype(o_ref.dtype)


def nn_forward(x, weight, bias):
    """Forward pass of `NN`: x.view(-1, F) @ W^T + b  ->  (batch, 1).

    weight: (1, F) as in torch.nn.Linear; bias: (1,).
    """
    num_features = weight.shape[-1]
    x2d = x.reshape(-1, num_features)            # torch `x.view(-1, numFeatures)`
    batch = x2d.shape[0]
    out_dtype = x2d.dtype

    # Pick the batch tile: pad batch up to a lane-dense multiple of 128, cap tiles at _TM_MAX.
    batch_p = pl.cdiv(batch, _LANES) * _LANES
    if batch_p <= _TM_MAX:
        tm = batch_p
    else:
        tm = _TM_MAX
        batch_p = pl.cdiv(batch, tm) * tm
    n_tiles = batch_p // tm

    if batch_p != batch:
        x2d = jnp.pad(x2d, ((0, batch_p - batch), (0, 0)))

    # Row-major-contiguous reshapes: pure layout plumbing, no data movement of substance.
    x3d = x2d.reshape(batch_p // _LANES, _LANES, num_features)
    w3d = weight.reshape(1, 1, num_features)
    b2d = bias.astype(jnp.float32).reshape(1, 1)

    x_bytes = int(jnp.dtype(x2d.dtype).itemsize)
    o_bytes = int(jnp.dtype(out_dtype).itemsize)
    cost = pl.CostEstimate(
        flops=2 * batch_p * num_features,
        transcendentals=0,
        bytes_accessed=batch_p * num_features * x_bytes
        + batch_p * o_bytes
        + num_features * int(jnp.dtype(weight.dtype).itemsize),
    )

    out = pl.pallas_call(
        _linear_kernel,
        out_shape=jax.ShapeDtypeStruct((batch_p // _LANES, _LANES), out_dtype),
        grid_spec=pl.GridSpec(
            grid=(n_tiles,),
            in_specs=[
                pl.BlockSpec((tm // _LANES, _LANES, num_features),
                             lambda i: (i, 0, 0)),
                pl.BlockSpec((1, 1, num_features), lambda i: (0, 0, 0)),
                pl.BlockSpec(memory_space=pltpu.MemorySpace.SMEM),
            ],
            out_specs=pl.BlockSpec((tm // _LANES, _LANES), lambda i: (i, 0)),
        ),
        compiler_params=pltpu.CompilerParams(
            dimension_semantics=("parallel",),
        ),
        cost_estimate=cost,
    )(x3d, w3d, b2d)

    # Lane-dense (batch_p/128, 128) slab back to the module's (batch, 1) result.
    return out.reshape(batch_p, 1)[:batch]


if __name__ == "__main__":
    key = jax.random.PRNGKey(0)
    kx, kw, kb, kx2 = jax.random.split(key, 4)

    batch = 8
    x = jax.random.normal(kx, (batch, NUM_FEATURES), dtype=jnp.float32)

    # Deterministic parameter init matching nn.Linear(numFeatures, 1) shapes:
    # weight (1, F), bias (1,), uniform(-1/sqrt(F), 1/sqrt(F)) like PyTorch default.
    bound = 1.0 / (NUM_FEATURES ** 0.5)
    weight = jax.random.uniform(kw, (1, NUM_FEATURES), dtype=jnp.float32,
                                minval=-bound, maxval=bound)
    bias = jax.random.uniform(kb, (1,), dtype=jnp.float32,
                              minval=-bound, maxval=bound)

    y = jax.block_until_ready(nn_forward(x, weight, bias))
    y_ref = x.reshape(-1, NUM_FEATURES) @ weight.T + bias
    assert y.shape == (batch, 1)
    assert jnp.allclose(y, y_ref, atol=1e-5, rtol=1e-5)

    # Second check: a batch that is not a multiple of 128 exercises the pad/trim
    # and lane-dense writeback paths.
    x_big = jax.random.normal(kx2, (200, NUM_FEATURES), dtype=jnp.float32)
    y_big = jax.block_until_ready(nn_forward(x_big, weight, bias))
    y_big_ref = x_big @ weight.T + bias
    assert y_big.shape == (200, 1)
    assert jnp.allclose(y_big, y_big_ref, atol=1e-5, rtol=1e-5)

    print("KERNEL_OK")
</pallas_src>

<mosaic_0001>
module attributes {stable_mosaic.version = 11 : i64} {
  func.func @_linear_kernel(%arg0: i32, %arg1: memref<1x128x32xf32, #tpu.memory_space<vmem>>, %arg2: memref<1x1x32xf32, #tpu.memory_space<vmem>>, %arg3: memref<1x1xf32, #tpu.memory_space<smem>>, %arg4: memref<1x128xf32, #tpu.memory_space<vmem>>) attributes {dimension_semantics = [#tpu.dimension_semantics<parallel>], iteration_bounds = array<i64: 1>, scalar_prefetch = 0 : i64, scratch_operands = 0 : i64, tpu.core_type = #tpu.core_type<tc>, window_params = [{transform_indices = @transform_0, window_bounds = array<i64: 1, 128, 32>}, {pipeline_mode = #tpu.pipeline_mode<synchronous>, transform_indices = @transform_1, window_bounds = array<i64: 1, 1, 32>}, {transform_indices = @transform_2, window_bounds = array<i64: 1, 1>}, {transform_indices = @transform_3, window_bounds = array<i64: 1, 128>}]} {
    %c0 = arith.constant 0 : index
    %c0_0 = arith.constant 0 : index
    %c0_1 = arith.constant 0 : index
    %0 = vector.load %arg1[%c0, %c0_0, %c0_1] : memref<1x128x32xf32, #tpu.memory_space<vmem>>, vector<1x128x32xf32>
    %c0_2 = arith.constant 0 : index
    %c0_3 = arith.constant 0 : index
    %c0_4 = arith.constant 0 : index
    %1 = vector.load %arg2[%c0_2, %c0_3, %c0_4] : memref<1x1x32xf32, #tpu.memory_space<vmem>>, vector<1x1x32xf32>
    %c0_5 = arith.constant 0 : index
    %c0_6 = arith.constant 0 : index
    %2 = memref.load %arg3[%c0_5, %c0_6] : memref<1x1xf32, #tpu.memory_space<smem>>
    %3 = vector.broadcast %1 : vector<1x1x32xf32> to vector<1x128x32xf32>
    %4 = arith.mulf %0, %3 : vector<1x128x32xf32>
    %cst = arith.constant dense<0.000000e+00> : vector<1x128xf32>
    %5 = vector.multi_reduction <add>, %4, %cst [2] : vector<1x128x32xf32> to vector<1x128xf32>
    %6 = vector.broadcast %2 : f32 to vector<1x128xf32>
    %7 = arith.addf %5, %6 : vector<1x128xf32>
    %c0_7 = arith.constant 0 : index
    %c0_8 = arith.constant 0 : index
    %8 = vector.load %arg4[%c0_7, %c0_8] : memref<1x128xf32, #tpu.memory_space<vmem>>, vector<1x128xf32>
    tpu.vector_store %arg4[%c0_7, %c0_8], %7 {strides = array<i32>} : memref<1x128xf32, #tpu.memory_space<vmem>>, vector<1x128xf32>,
    return
  }
  func.func @transform_0(%arg0: i32) -> (i32, i32, i32) {
    %c0_i32 = arith.constant 0 : i32
    %c0_i32_0 = arith.constant 0 : i32
    %c0_i32_1 = arith.constant 0 : i32
    return %arg0, %c0_i32, %c0_i32_0 : i32, i32, i32
  }
  func.func @transform_1(%arg0: i32) -> (i32, i32, i32) {
    %c0_i32 = arith.constant 0 : i32
    %c0_i32_0 = arith.constant 0 : i32
    %c0_i32_1 = arith.constant 0 : i32
    %c0_i32_2 = arith.constant 0 : i32
    return %c0_i32, %c0_i32_0, %c0_i32_1 : i32, i32, i32
  }
  func.func @transform_2(%arg0: i32) -> (i32, i32) {
    %c0_i32 = arith.constant 0 : i32
    %c0_i32_0 = arith.constant 0 : i32
    %c0_i32_1 = arith.constant 0 : i32
    return %c0_i32, %c0_i32_0 : i32, i32
  }
  func.func @transform_3(%arg0: i32) -> (i32, i32) {
    %c0_i32 = arith.constant 0 : i32
    %c0_i32_0 = arith.constant 0 : i32
    return %arg0, %c0_i32 : i32, i32
  }
}

</mosaic_0001>

<llo_original>
// kernel: tpu_custom_call.1
$region0: #{tpu_custom_call.1}
  #allocation0 [shape = 'u32[]', space=smem, size = 0x4, offset = 0x4, fixed_abs, tag = 'smem constant byte address 0x4 - core index']
  #allocation1 [shape = 'u32[144,128]{1,0:T(1,128)}', space=vmem, size = 0x12000, scoped, tag = 'internal scratch']
  #allocation2 [shape = 'f32[1,1]{1,0:T(1,128)S(6)}', space=smem, size = 0x200, scoped, tag = 'scoped memory for tpu_custom_call.1']
  %s0 = inlined_call_operand.vmem [shape: f32[1,128,32], index: 0, kind: input, shape index: {}]
  %s1 = inlined_call_operand.vmem [shape: f32[1,1,32], index: 1, kind: input, shape index: {}]
  %s2 = inlined_call_operand.<no memory space> [shape: f32[1,1], index: 2, kind: input, shape index: {}]
  %s3 = inlined_call_operand.hbm [shape: f32[1,128], index: 3, kind: output, shape index: {}]
  %s4 = sld [smem:[#allocation0]]
  $region22: #{tpu_custom_call.1} parent=0
    _
  %s6 = ssub.s32 1, %s4
  %s7 = scalar_select 0, %s6, %s4
  %8 = sst [smem:[#allocation2]] %s2
  $region1: #{tpu_custom_call.1} parent=0
    #allocation3 [shape = 'u8[512]{0}', space=vmem, size = 0x400, scoped, tag = 'output window, operand 0, single buffered']
    #allocation4 [shape = 's32[1]{0}', space=sflag, size = 0x4, scoped, tag = 'scoped memory for tpu_custom_call.1']
    %9 = vsyncpa [#allocation4], 0
    // Predicated region
    $region2: #{tpu_custom_call.1} parent=1 // pred_check
      _
    $region3: #{tpu_custom_call.1} parent=1 // pred_check_branch
      %11 = sbr.rel (0) target = $region5
    $region4: #{tpu_custom_call.1} parent=1 // pred_region
      _
    $region5: #{tpu_custom_call.1} parent=1 // pred_fallthru
      _
    // Predicated region
    $region6: #{tpu_custom_call.1} parent=1 // pred_check
      _
    $region7: #{tpu_custom_call.1} parent=1 // pred_check_branch
      %13 = sbr.rel (0) target = $region9
    $region8: #{tpu_custom_call.1} parent=1 // pred_region
      _
    $region9: #{tpu_custom_call.1} parent=1 // pred_fallthru
      _
    // Predicated region
    $region10: #{tpu_custom_call.1} parent=1 // pred_check
      _
    $region11: #{tpu_custom_call.1} parent=1 // pred_check_branch
      %15 = sbr.rel (0) target = $region13
    $region12: #{tpu_custom_call.1} parent=1 // pred_region
      _
    $region13: #{tpu_custom_call.1} parent=1 // pred_fallthru
      _
    %v16 = vld [vmem:[%s0] sm:$0xff]
    %v17 = vld [vmem:[%s0 + $0x8] sm:$0xff]
    %v18 = vld [vmem:[%s0 + $0x10] sm:$0xff]
    %v19 = vld [vmem:[%s0 + $0x18] sm:$0xff]
    %v20 = vld [vmem:[%s0 + $0x20] sm:$0xff]
    %v21 = vld [vmem:[%s0 + $0x28] sm:$0xff]
    %v22 = vld [vmem:[%s0 + $0x30] sm:$0xff]
    %v23 = vld [vmem:[%s0 + $0x38] sm:$0xff]
    %v24 = vld [vmem:[%s0 + $0x40] sm:$0xff]
    %v25 = vld [vmem:[%s0 + $0x48] sm:$0xff]
    %v26 = vld [vmem:[%s0 + $0x50] sm:$0xff]
    %v27 = vld [vmem:[%s0 + $0x58] sm:$0xff]
    %v28 = vld [vmem:[%s0 + $0x60] sm:$0xff]
    %v29 = vld [vmem:[%s0 + $0x68] sm:$0xff]
    %v30 = vld [vmem:[%s0 + $0x70] sm:$0xff]
    %v31 = vld [vmem:[%s0 + $0x78] sm:$0xff]
    %v32 = vld [vmem:[%s1] sm:$0x1]
    %s33 = sld [smem:[#allocation2]]
    %v35 = vlaneseq
    %v36 = vshrl.u32 %v35, 7
    %v37 = vsub.s32 0, %v36
    %v38 = vrot.slane %v32, %v37
    %v40 = vmul.f32 %v16, %v38
    %v41 = vmul.f32 %v17, %v38
    %v42 = vmul.f32 %v18, %v38
    %v43 = vmul.f32 %v19, %v38
    %v44 = vmul.f32 %v20, %v38
    %v45 = vmul.f32 %v21, %v38
    %v46 = vmul.f32 %v22, %v38
    %v47 = vmul.f32 %v23, %v38
    %v48 = vmul.f32 %v24, %v38
    %v49 = vmul.f32 %v25, %v38
    %v50 = vmul.f32 %v26, %v38
    %v51 = vmul.f32 %v27, %v38
    %v52 = vmul.f32 %v28, %v38
    %v53 = vmul.f32 %v29, %v38
    %v54 = vmul.f32 %v30, %v38
    %v55 = vmul.f32 %v31, %v38
    %vm56 = vcmask 261120
    %v57 = vsel %vm56, %v40, 0.0
    %58 = vadd.xlane.f32.xlu0 %v57
    %v59 = vpop.xlane.xlu0 %58
    %v60 = vsel %vm56, %v41, 0.0
    %61 = vadd.xlane.f32.xlu0 %v60
    %v62 = vpop.xlane.xlu0 %61
    %v63 = vsel %vm56, %v42, 0.0
    %64 = vadd.xlane.f32.xlu0 %v63
    %v65 = vpop.xlane.xlu0 %64
    %v66 = vsel %vm56, %v43, 0.0
    %67 = vadd.xlane.f32.xlu0 %v66
    %v68 = vpop.xlane.xlu0 %67
    %v69 = vsel %vm56, %v44, 0.0
    %70 = vadd.xlane.f32.xlu0 %v69
    %v71 = vpop.xlane.xlu0 %70
    %v72 = vsel %vm56, %v45, 0.0
    %73 = vadd.xlane.f32.xlu0 %v72
    %v74 = vpop.xlane.xlu0 %73
    %v75 = vsel %vm56, %v46, 0.0
    %76 = vadd.xlane.f32.xlu0 %v75
    %v77 = vpop.xlane.xlu0 %76
    %v78 = vsel %vm56, %v47, 0.0
    %79 = vadd.xlane.f32.xlu0 %v78
    %v80 = vpop.xlane.xlu0 %79
    %v81 = vsel %vm56, %v48, 0.0
    %82 = vadd.xlane.f32.xlu0 %v81
    %v83 = vpop.xlane.xlu0 %82
    %v84 = vsel %vm56, %v49, 0.0
    %85 = vadd.xlane.f32.xlu0 %v84
    %v86 = vpop.xlane.xlu0 %85
    %v87 = vsel %vm56, %v50, 0.0
    %88 = vadd.xlane.f32.xlu0 %v87
    %v89 = vpop.xlane.xlu0 %88
    %v90 = vsel %vm56, %v51, 0.0
    %91 = vadd.xlane.f32.xlu0 %v90
    %v92 = vpop.xlane.xlu0 %91
    %v93 = vsel %vm56, %v52, 0.0
    %94 = vadd.xlane.f32.xlu0 %v93
    %v95 = vpop.xlane.xlu0 %94
    %v96 = vsel %vm56, %v53, 0.0
    %97 = vadd.xlane.f32.xlu0 %v96
    %v98 = vpop.xlane.xlu0 %97
    %v99 = vsel %vm56, %v54, 0.0
    %100 = vadd.xlane.f32.xlu0 %v99
    %v101 = vpop.xlane.xlu0 %100
    %v102 = vsel %vm56, %v55, 0.0
    %103 = vadd.xlane.f32.xlu0 %v102
    %v104 = vpop.xlane.xlu0 %103
    %v105 = vstv %s33
    %v106 = vadd.f32 %v59, %v105
    %v107 = vadd.f32 %v62, %v105
    %v108 = vadd.f32 %v65, %v105
    %v109 = vadd.f32 %v68, %v105
    %v110 = vadd.f32 %v71, %v105
    %v111 = vadd.f32 %v74, %v105
    %v112 = vadd.f32 %v77, %v105
    %v113 = vadd.f32 %v80, %v105
    %v114 = vadd.f32 %v83, %v105
    %v115 = vadd.f32 %v86, %v105
    %v116 = vadd.f32 %v89, %v105
    %v117 = vadd.f32 %v92, %v105
    %v118 = vadd.f32 %v95, %v105
    %v119 = vadd.f32 %v98, %v105
    %v120 = vadd.f32 %v101, %v105
    %v121 = vadd.f32 %v104, %v105
    %v138 = vlaneseq
    %v139 = vand.u32 %v138, 127
    %v140 = vlaneseq
    %v141 = vshrl.u32 %v140, 7
    %v142 = vsub.s32 %v139, %v141
    %v143 = vrot.slane %v106, %v142
    %v144 = vadd.s32 %v139, 4294967288
    %v145 = vlaneseq
    %v146 = vshrl.u32 %v145, 7
    %v147 = vsub.s32 %v144, %v146
    %v148 = vrot.slane %v107, %v147
    %vm149 = vcmask 130112
    %v150 = vsel %vm149, %v148, %v143
    %v151 = vadd.s32 %v139, 4294967280
    %v152 = vlaneseq
    %v153 = vshrl.u32 %v152, 7
    %v154 = vsub.s32 %v151, %v153
    %v155 = vrot.slane %v108, %v154
    %vm156 = vcmask 195712
    %v157 = vsel %vm156, %v155, %v150
    %v158 = vadd.s32 %v139, 4294967272
    %v159 = vlaneseq
    %v160 = vshrl.u32 %v159, 7
    %v161 = vsub.s32 %v158, %v160
    %v162 = vrot.slane %v109, %v161
    %vm163 = vcmask 261312
    %v164 = vsel %vm163, %v162, %v157
    %v165 = vadd.s32 %v139, 4294967264
    %v166 = vlaneseq
    %v167 = vshrl.u32 %v166, 7
    %v168 = vsub.s32 %v165, %v167
    %v169 = vrot.slane %v110, %v168
    %vm170 = vcmask 326912
    %v171 = vsel %vm170, %v169, %v164
    %v172 = vadd.s32 %v139, 4294967256
    %v173 = vlaneseq
    %v174 = vshrl.u32 %v173, 7
    %v175 = vsub.s32 %v172, %v174
    %v176 = vrot.slane %v111, %v175
    %vm177 = vcmask 392512
    %v178 = vsel %vm177, %v176, %v171
    %v179 = vadd.s32 %v139, 4294967248
    %v180 = vlaneseq
    %v181 = vshrl.u32 %v180, 7
    %v182 = vsub.s32 %v179, %v181
    %v183 = vrot.slane %v112, %v182
    %vm184 = vcmask 458112
    %v185 = vsel %vm184, %v183, %v178
    %v186 = vadd.s32 %v139, 4294967240
    %v187 = vlaneseq
    %v188 = vshrl.u32 %v187, 7
    %v189 = vsub.s32 %v186, %v188
    %v190 = vrot.slane %v113, %v189
    %vm191 = vcmask 523712
    %v192 = vsel %vm191, %v190, %v185
    %v193 = vadd.s32 %v139, 4294967232
    %v194 = vlaneseq
    %v195 = vshrl.u32 %v194, 7
    %v196 = vsub.s32 %v193, %v195
    %v197 = vrot.slane %v114, %v196
    %vm198 = vcmask 589312
    %v199 = vsel %vm198, %v197, %v192
    %v200 = vadd.s32 %v139, 4294967224
    %v201 = vlaneseq
    %v202 = vshrl.u32 %v201, 7
    %v203 = vsub.s32 %v200, %v202
    %v204 = vrot.slane %v115, %v203
    %vm205 = vcmask 654912
    %v206 = vsel %vm205, %v204, %v199
    %v207 = vadd.s32 %v139, 4294967216
    %v208 = vlaneseq
    %v209 = vshrl.u32 %v208, 7
    %v210 = vsub.s32 %v207, %v209
    %v211 = vrot.slane %v116, %v210
    %vm212 = vcmask 720512
    %v213 = vsel %vm212, %v211, %v206
    %v214 = vadd.s32 %v139, 4294967208
    %v215 = vlaneseq
    %v216 = vshrl.u32 %v215, 7
    %v217 = vsub.s32 %v214, %v216
    %v218 = vrot.slane %v117, %v217
    %vm219 = vcmask 786112
    %v220 = vsel %vm219, %v218, %v213
    %v221 = vadd.s32 %v139, 4294967200
    %v222 = vlaneseq
    %v223 = vshrl.u32 %v222, 7
    %v224 = vsub.s32 %v221, %v223
    %v225 = vrot.slane %v118, %v224
    %vm226 = vcmask 851712
    %v227 = vsel %vm226, %v225, %v220
    %v228 = vadd.s32 %v139, 4294967192
    %v229 = vlaneseq
    %v230 = vshrl.u32 %v229, 7
    %v231 = vsub.s32 %v228, %v230
    %v232 = vrot.slane %v119, %v231
    %vm233 = vcmask 917312
    %v234 = vsel %vm233, %v232, %v227
    %v235 = vadd.s32 %v139, 4294967184
    %v236 = vlaneseq
    %v237 = vshrl.u32 %v236, 7
    %v238 = vsub.s32 %v235, %v237
    %v239 = vrot.slane %v120, %v238
    %vm240 = vcmask 982912
    %v241 = vsel %vm240, %v239, %v234
    %v242 = vadd.s32 %v139, 4294967176
    %v243 = vlaneseq
    %v244 = vshrl.u32 %v243, 7
    %v245 = vsub.s32 %v242, %v244
    %v246 = vrot.slane %v121, %v245
    %vm247 = vcmask 1048512
    %v248 = vsel %vm247, %v246, %v241
    %250 = vst [vmem:[#allocation3] sm:$0x1] %v248
    // Predicated region
    $region14: #{tpu_custom_call.1} parent=1 // pred_check
      _
    $region15: #{tpu_custom_call.1} parent=1 // pred_check_branch
      %252 = sbr.rel (0) target = $region17
    $region16: #{tpu_custom_call.1} parent=1 // pred_region
      %s254 = ssub.s32 16, 16
      %255 = vsyncadd [#allocation4], %s254
      %s257 = sshll.u32 [#allocation3], 4
      %s258 = int_to_ptr.vmem [resolvable:$true] %s257
      %260 = dma.vmem_to_hbm [thread:$0]  %s258, 16, %s3, [#allocation4]
    $region17: #{tpu_custom_call.1} parent=1 // pred_fallthru
      _
    // Predicated region
    $region18: #{tpu_custom_call.1} parent=1 // pred_check
      _
    $region19: #{tpu_custom_call.1} parent=1 // pred_check_branch
      %262 = sbr.rel (0) target = $region21
    $region20: #{tpu_custom_call.1} parent=1 // pred_region
      %263 = dma.done [#allocation4], 16
    $region21: #{tpu_custom_call.1} parent=1 // pred_fallthru
      _
    %264 = vsyncpa [#allocation4], 1

</llo_original>
